<compile_context>
chip_gen: v7x
topology: tpu7x:2x2x1
jax: 0.10.0
libtpu: 0.0.40
codegen_flags: <defaults>
</compile_context>

<pallas_src>
import functools
import math

import numpy as np
import jax
import jax.numpy as jnp
from jax import lax
from jax.experimental import pallas as pl
from jax.experimental.pallas import tpu as pltpu


def _round_up(x, m):
    return (x + m - 1) // m * m


# --------------------------------------------------------------------------- kernel A
def _conv_stats_kernel(x_ref, xh_ref, w_ref, b_ref, conv_ref, stats_ref,
                       *, q_taps, tile_l, l_out, c_out):
    """One conv tile (single MXU matmul) + masked partial BN statistics.

    x_ref    : (1, tile_l, Cs)     stride-folded input rows for this output tile
    xh_ref   : (1, 8, Cs)          next 8 rows (halo; only the first q_taps-1 used)
    w_ref    : (q_taps*Cs, c_out)  tap-concatenated conv weight
    b_ref    : (1, c_out)          conv bias
    conv_ref : (1, tile_l, c_out)  f32 conv output tile
    stats_ref: (1, 1, 8, c_out)    row0 = sum(valid conv), row1 = sum(valid conv^2)
    """
    xm = x_ref[0]                                            # (tile_l, Cs)
    if q_taps > 1:
        window = jnp.concatenate([xm, xh_ref[0][: q_taps - 1, :]], axis=0)
    else:
        window = xm                                          # (tile_l + q_taps - 1, Cs)

    # im2col-lite: concatenate the q_taps shifted row-windows along lanes so the whole
    # conv tile is one matmul with contraction q_taps*Cs (= padded K*C_in).
    cols = jnp.concatenate(
        [window[q:q + tile_l, :] for q in range(q_taps)], axis=1)   # (tile_l, q*Cs)
    acc = jnp.dot(cols, w_ref[...], preferred_element_type=jnp.float32)
    acc = acc + b_ref[...]                                   # conv bias (broadcast once)
    conv_ref[0] = acc

    # Masked partial statistics for BatchNorm (rows >= l_out are tile padding).
    t = pl.program_id(1)
    row = lax.broadcasted_iota(jnp.int32, (tile_l, 1), 0) + t * tile_l
    valid = (row < l_out).astype(jnp.float32)                # (tile_l, 1)
    av = acc * valid
    psum = jnp.sum(av, axis=0, keepdims=True)                # (1, c_out)
    psq = jnp.sum(av * acc, axis=0, keepdims=True)           # (1, c_out) = sum(valid*acc^2)
    stats_ref[0, 0] = jnp.concatenate(
        [psum, psq, jnp.zeros((6, c_out), jnp.float32)], axis=0)   # (8, c_out)


# --------------------------------------------------------------------------- kernel B
def _affine_kernel(y_ref, scale_ref, shift_ref, o_ref):
    """Lane-dense fused BatchNorm normalize + affine: o = y*scale + shift."""
    o_ref[...] = (y_ref[...] * scale_ref[...] + shift_ref[...]).astype(o_ref.dtype)


# --------------------------------------------------------------------------- wrapper
@functools.partial(jax.jit, static_argnames=("kernel_size", "stride", "eps"))
def patch_merging_tconv(x, conv_w, conv_b, gamma, beta,
                        kernel_size=7, stride=2, eps=1e-5):
    """x: (B, L, C_in) channels-last -> (B, L_out, C_out).

    Equivalent to PatchMergingTconv.forward: permute -> Conv1d(stride=2, pad=(K-1)//2)
    -> BatchNorm1d (train-mode batch stats) -> permute back.
    """
    B, L, C_in = x.shape
    C_out = conv_w.shape[0]
    K = kernel_size
    pad = (K - 1) // 2
    L_out = (L + 2 * pad - K) // stride + 1

    Q = pl.cdiv(K, stride)           # taps after folding the stride into channels
    Cs = stride * C_in               # stride-folded channel width
    HALO = 8                         # halo rows fetched per tile (>= Q-1, mult. of 8)
    assert Q - 1 <= HALO

    # ----- L_out tiling -----
    tile_l = min(256, _round_up(L_out, 8))
    nT = pl.cdiv(L_out, tile_l)
    L_out_p = nT * tile_l            # padded row count (multiple of tile_l)

    # ----- stride-folded, zero-padded input: (B, L_out_p + HALO, stride*C_in) -----
    Lr = L_out_p + HALO
    Lp_total = stride * Lr
    right_pad = Lp_total - pad - L
    assert right_pad >= pad
    x_pad = jnp.pad(x, ((0, 0), (pad, right_pad), (0, 0)))
    x_r = x_pad.reshape(B, Lr, Cs)

    # ----- tap-concatenated weight: (Q*Cs, C_out); phantom taps (k >= K) are zero -----
    w_t = jnp.transpose(conv_w, (2, 1, 0))                         # (K, C_in, C_out)
    w_t = jnp.pad(w_t, ((0, Q * stride - K), (0, 0), (0, 0)))      # (Q*stride, C_in, C_out)
    w2 = w_t.reshape(Q * Cs, C_out).astype(x.dtype)                # bf16 MXU if x is bf16
    cb = conv_b.reshape(1, C_out).astype(jnp.float32)

    kernel_a = functools.partial(_conv_stats_kernel, q_taps=Q, tile_l=tile_l,
                                 l_out=L_out, c_out=C_out)
    conv, stats = pl.pallas_call(
        kernel_a,
        out_shape=(jax.ShapeDtypeStruct((B, L_out_p, C_out), jnp.float32),
                   jax.ShapeDtypeStruct((B, nT, 8, C_out), jnp.float32)),
        grid=(B, nT),
        in_specs=[
            pl.BlockSpec((1, tile_l, Cs), lambda b, t: (b, t, 0)),
            pl.BlockSpec((1, HALO, Cs),
                         lambda b, t: (b, (t + 1) * (tile_l // HALO), 0)),
            pl.BlockSpec((Q * Cs, C_out), lambda b, t: (0, 0)),
            pl.BlockSpec((1, C_out), lambda b, t: (0, 0)),
        ],
        out_specs=(
            pl.BlockSpec((1, tile_l, C_out), lambda b, t: (b, t, 0)),
            pl.BlockSpec((1, 1, 8, C_out), lambda b, t: (b, t, 0, 0)),
        ),
        compiler_params=pltpu.CompilerParams(
            dimension_semantics=("parallel", "parallel"),
            vmem_limit_bytes=48 * 1024 * 1024),
    )(x_r, x_r, w2, cb)

    # ----- global batch statistics (tiny (C_out,) math) -----
    tot_sum = jnp.sum(stats[:, :, 0, :], axis=(0, 1))
    tot_ssq = jnp.sum(stats[:, :, 1, :], axis=(0, 1))
    cnt = float(B * L_out)
    mean = tot_sum / cnt
    var = jnp.maximum(tot_ssq / cnt - mean * mean, 0.0)            # biased variance (f32)
    inv = lax.rsqrt(var + eps)
    scale = gamma.astype(jnp.float32) * inv
    shift = beta.astype(jnp.float32) - mean * scale

    # ----- lane-dense normalize + affine over a packed (rows, g*C_out) view -----
    if C_out <= 128 and 128 % C_out == 0 and (B * L_out_p) % (128 // C_out) == 0:
        g = 128 // C_out                                           # pack g rows -> 128 lanes
    else:
        g = 1
    R = (B * L_out_p) // g
    W = g * C_out
    if R % 512 == 0:
        tile_r = 512
    elif R % 8 == 0:
        tile_r = math.gcd(R, 512)
    else:
        tile_r = R
    conv_flat = conv.reshape(R, W)                                 # free reshape (row-major)
    scale_row = jnp.tile(scale, g).reshape(1, W)
    shift_row = jnp.tile(shift, g).reshape(1, W)

    out_flat = pl.pallas_call(
        _affine_kernel,
        out_shape=jax.ShapeDtypeStruct((R, W), x.dtype),
        grid=(R // tile_r,),
        in_specs=[
            pl.BlockSpec((tile_r, W), lambda i: (i, 0)),
            pl.BlockSpec((1, W), lambda i: (0, 0)),
            pl.BlockSpec((1, W), lambda i: (0, 0)),
        ],
        out_specs=pl.BlockSpec((tile_r, W), lambda i: (i, 0)),
        compiler_params=pltpu.CompilerParams(
            dimension_semantics=("parallel",),
            vmem_limit_bytes=48 * 1024 * 1024),
    )(conv_flat, scale_row, shift_row)

    return out_flat.reshape(B, L_out_p, C_out)[:, :L_out, :]


# --------------------------------------------------------------------------- reference
def _reference(x, w, cb, gamma, beta, ksize, stride, eps):
    """Pure numpy reference of Conv1d(stride=2) + train-mode BatchNorm1d."""
    x = np.asarray(x, np.float64)            # (B, L, C_in)
    w = np.asarray(w, np.float64)            # (C_out, C_in, K)
    B, L, C_in = x.shape
    C_out = w.shape[0]
    pad = (ksize - 1) // 2
    xp = np.pad(x, ((0, 0), (pad, pad), (0, 0)))
    L_out = (L + 2 * pad - ksize) // stride + 1
    conv = np.zeros((B, L_out, C_out))
    for lo in range(L_out):
        window = xp[:, lo * stride:lo * stride + ksize, :]   # (B, K, C_in)
        conv[:, lo, :] = np.einsum('bkc,ock->bo', window, w)
    conv += np.asarray(cb, np.float64)[None, None, :]
    mean = conv.mean(axis=(0, 1), keepdims=True)
    var = conv.var(axis=(0, 1), keepdims=True)               # biased
    y = (conv - mean) / np.sqrt(var + eps)
    return (y * np.asarray(gamma, np.float64)[None, None, :]
            + np.asarray(beta, np.float64)[None, None, :])


if __name__ == "__main__":
    B, L, dim_in, dim_out = 2, 16, 4, 8
    ksize, stride, eps = 7, 2, 1e-5

    key = jax.random.PRNGKey(0)
    k1, k2, k3, k4, k5 = jax.random.split(key, 5)
    bound = 1.0 / math.sqrt(dim_in * ksize)                 # torch Conv1d default init
    conv_w = jax.random.uniform(k1, (dim_out, dim_in, ksize), jnp.float32,
                                -bound, bound)
    conv_b = jax.random.uniform(k2, (dim_out,), jnp.float32, -bound, bound)
    gamma = 1.0 + 0.1 * jax.random.normal(k3, (dim_out,), jnp.float32)
    beta = 0.1 * jax.random.normal(k4, (dim_out,), jnp.float32)
    x = jax.random.normal(k5, (B, L, dim_in), jnp.float32)

    out = patch_merging_tconv(x, conv_w, conv_b, gamma, beta,
                              kernel_size=ksize, stride=stride, eps=eps)
    out = jax.block_until_ready(out)

    ref = _reference(x, conv_w, conv_b, gamma, beta, ksize, stride, eps)
    np.testing.assert_allclose(np.asarray(out), ref, rtol=2e-2, atol=2e-2)
    print("KERNEL_OK")
</pallas_src>

<mosaic_0001>
module attributes {stable_mosaic.version = 11 : i64} {
  func.func @_conv_stats_kernel(%arg0: i32, %arg1: i32, %arg2: memref<1x8x8xf32, #tpu.memory_space<vmem>>, %arg3: memref<1x8x8xf32, #tpu.memory_space<vmem>>, %arg4: memref<32x8xf32, #tpu.memory_space<vmem>>, %arg5: memref<1x8xf32, #tpu.memory_space<vmem>>, %arg6: memref<1x8x8xf32, #tpu.memory_space<vmem>>, %arg7: memref<1x1x8x8xf32, #tpu.memory_space<vmem>>) attributes {dimension_semantics = [#tpu.dimension_semantics<parallel>, #tpu.dimension_semantics<parallel>], iteration_bounds = array<i64: 2, 1>, scalar_prefetch = 0 : i64, scratch_operands = 0 : i64, tpu.core_type = #tpu.core_type<tc>, window_params = [{transform_indices = @transform_0, window_bounds = array<i64: 1, 8, 8>}, {transform_indices = @transform_1, window_bounds = array<i64: 1, 8, 8>}, {pipeline_mode = #tpu.pipeline_mode<synchronous>, transform_indices = @transform_2, window_bounds = array<i64: 32, 8>}, {pipeline_mode = #tpu.pipeline_mode<synchronous>, transform_indices = @transform_3, window_bounds = array<i64: 1, 8>}, {transform_indices = @transform_4, window_bounds = array<i64: 1, 8, 8>}, {transform_indices = @transform_5, window_bounds = array<i64: 1, 1, 8, 8>}]} {
    %c0 = arith.constant 0 : index
    %c0_0 = arith.constant 0 : index
    %c0_1 = arith.constant 0 : index
    %0 = vector.load %arg2[%c0, %c0_0, %c0_1] : memref<1x8x8xf32, #tpu.memory_space<vmem>>, vector<1x8x8xf32>
    %1 = vector.shape_cast %0 : vector<1x8x8xf32> to vector<8x8xf32>
    %c0_2 = arith.constant 0 : index
    %c0_3 = arith.constant 0 : index
    %c0_4 = arith.constant 0 : index
    %2 = vector.load %arg3[%c0_2, %c0_3, %c0_4] : memref<1x8x8xf32, #tpu.memory_space<vmem>>, vector<1x8x8xf32>
    %3 = vector.shape_cast %2 : vector<1x8x8xf32> to vector<8x8xf32>
    %4 = vector.extract_strided_slice %3 {offsets = [0, 0], sizes = [3, 8], strides = [1, 1]} : vector<8x8xf32> to vector<3x8xf32>
    %5 = tpu.concatenate %1, %4 in 0 : vector<8x8xf32>, vector<3x8xf32> -> vector<11x8xf32>
    %6 = vector.extract_strided_slice %5 {offsets = [0, 0], sizes = [8, 8], strides = [1, 1]} : vector<11x8xf32> to vector<8x8xf32>
    %7 = vector.extract_strided_slice %5 {offsets = [1, 0], sizes = [8, 8], strides = [1, 1]} : vector<11x8xf32> to vector<8x8xf32>
    %8 = vector.extract_strided_slice %5 {offsets = [2, 0], sizes = [8, 8], strides = [1, 1]} : vector<11x8xf32> to vector<8x8xf32>
    %9 = vector.extract_strided_slice %5 {offsets = [3, 0], sizes = [8, 8], strides = [1, 1]} : vector<11x8xf32> to vector<8x8xf32>
    %10 = tpu.concatenate %6, %7, %8, %9 in 1 : vector<8x8xf32>, vector<8x8xf32>, vector<8x8xf32>, vector<8x8xf32> -> vector<8x32xf32>
    %c0_5 = arith.constant 0 : index
    %c0_6 = arith.constant 0 : index
    %11 = vector.load %arg4[%c0_5, %c0_6] : memref<32x8xf32, #tpu.memory_space<vmem>>, vector<32x8xf32>
    %cst = arith.constant dense<0.000000e+00> : vector<8x8xf32>
    %12 = tpu.matmul %10, %11, %cst {dimension_numbers = #tpu.dot_dimension_numbers<[1], [0], [0], [1], [0, 0, 1, 1], [], []>} : vector<8x32xf32>, vector<32x8xf32>, vector<8x8xf32> -> vector<8x8xf32>
    %c0_7 = arith.constant 0 : index
    %c0_8 = arith.constant 0 : index
    %13 = vector.load %arg5[%c0_7, %c0_8] : memref<1x8xf32, #tpu.memory_space<vmem>>, vector<1x8xf32>
    %14 = vector.broadcast %13 : vector<1x8xf32> to vector<8x8xf32>
    %15 = arith.addf %12, %14 : vector<8x8xf32>
    %c0_9 = arith.constant 0 : index
    %c0_10 = arith.constant 0 : index
    %c0_11 = arith.constant 0 : index
    %16 = vector.load %arg6[%c0_9, %c0_10, %c0_11] : memref<1x8x8xf32, #tpu.memory_space<vmem>>, vector<1x8x8xf32>
    %17 = vector.shape_cast %16 : vector<1x8x8xf32> to vector<8x8xf32>
    %18 = vector.shape_cast %15 : vector<8x8xf32> to vector<1x8x8xf32>
    tpu.vector_store %arg6[%c0_9, %c0_10, %c0_11], %18 {strides = array<i32>} : memref<1x8x8xf32, #tpu.memory_space<vmem>>, vector<1x8x8xf32>,
    %19 = tpu.iota {dimensions = array<i32: 0>} : vector<8x1xi32>
    %c8_i32 = arith.constant 8 : i32
    %20 = arith.muli %arg1, %c8_i32 : i32
    %21 = vector.broadcast %20 : i32 to vector<8x1xi32>
    %22 = arith.addi %19, %21 : vector<8x1xi32>
    %c8_i32_12 = arith.constant 8 : i32
    %23 = vector.broadcast %c8_i32_12 : i32 to vector<8x1xi32>
    %24 = arith.cmpi slt, %22, %23 : vector<8x1xi32>
    %25 = arith.extui %24 : vector<8x1xi1> to vector<8x1xi32>
    %26 = arith.sitofp %25 : vector<8x1xi32> to vector<8x1xf32>
    %27 = vector.broadcast %26 : vector<8x1xf32> to vector<8x8xf32>
    %28 = arith.mulf %15, %27 : vector<8x8xf32>
    %cst_13 = arith.constant dense<0.000000e+00> : vector<8xf32>
    %29 = vector.multi_reduction <add>, %28, %cst_13 [0] : vector<8x8xf32> to vector<8xf32>
    %30 = vector.shape_cast %29 : vector<8xf32> to vector<1x8xf32>
    %31 = arith.mulf %28, %15 : vector<8x8xf32>
    %cst_14 = arith.constant dense<0.000000e+00> : vector<8xf32>
    %32 = vector.multi_reduction <add>, %31, %cst_14 [0] : vector<8x8xf32> to vector<8xf32>
    %33 = vector.shape_cast %32 : vector<8xf32> to vector<1x8xf32>
    %cst_15 = arith.constant 0.000000e+00 : f32
    %34 = vector.broadcast %cst_15 : f32 to vector<6x8xf32>
    %35 = tpu.concatenate %30, %33, %34 in 0 : vector<1x8xf32>, vector<1x8xf32>, vector<6x8xf32> -> vector<8x8xf32>
    %c0_16 = arith.constant 0 : index
    %c0_17 = arith.constant 0 : index
    %c0_18 = arith.constant 0 : index
    %c0_19 = arith.constant 0 : index
    %36 = vector.load %arg7[%c0_16, %c0_17, %c0_18, %c0_19] : memref<1x1x8x8xf32, #tpu.memory_space<vmem>>, vector<1x1x8x8xf32>
    %37 = vector.shape_cast %36 : vector<1x1x8x8xf32> to vector<8x8xf32>
    %38 = vector.shape_cast %35 : vector<8x8xf32> to vector<1x1x8x8xf32>
    tpu.vector_store %arg7[%c0_16, %c0_17, %c0_18, %c0_19], %38 {strides = array<i32>} : memref<1x1x8x8xf32, #tpu.memory_space<vmem>>, vector<1x1x8x8xf32>,
    return
  }
  func.func @transform_0(%arg0: i32, %arg1: i32) -> (i32, i32, i32) {
    %c0_i32 = arith.constant 0 : i32
    %c0_i32_0 = arith.constant 0 : i32
    return %arg0, %arg1, %c0_i32 : i32, i32, i32
  }
  func.func @transform_1(%arg0: i32, %arg1: i32) -> (i32, i32, i32) {
    %c1_i32 = arith.constant 1 : i32
    %0 = arith.addi %arg1, %c1_i32 : i32
    %c1_i32_0 = arith.constant 1 : i32
    %1 = arith.muli %0, %c1_i32_0 : i32
    %c0_i32 = arith.constant 0 : i32
    %c0_i32_1 = arith.constant 0 : i32
    return %arg0, %1, %c0_i32 : i32, i32, i32
  }
  func.func @transform_2(%arg0: i32, %arg1: i32) -> (i32, i32) {
    %c0_i32 = arith.constant 0 : i32
    %c0_i32_0 = arith.constant 0 : i32
    %c0_i32_1 = arith.constant 0 : i32
    return %c0_i32, %c0_i32_0 : i32, i32
  }
  func.func @transform_3(%arg0: i32, %arg1: i32) -> (i32, i32) {
    %c0_i32 = arith.constant 0 : i32
    %c0_i32_0 = arith.constant 0 : i32
    %c0_i32_1 = arith.constant 0 : i32
    return %c0_i32, %c0_i32_0 : i32, i32
  }
  func.func @transform_4(%arg0: i32, %arg1: i32) -> (i32, i32, i32) {
    %c0_i32 = arith.constant 0 : i32
    %c0_i32_0 = arith.constant 0 : i32
    return %arg0, %arg1, %c0_i32 : i32, i32, i32
  }
  func.func @transform_5(%arg0: i32, %arg1: i32) -> (i32, i32, i32, i32) {
    %c0_i32 = arith.constant 0 : i32
    %c0_i32_0 = arith.constant 0 : i32
    %c0_i32_1 = arith.constant 0 : i32
    return %arg0, %arg1, %c0_i32, %c0_i32_0 : i32, i32, i32, i32
  }
}

module attributes {stable_mosaic.version = 11 : i64} {
  func.func @_affine_kernel(%arg0: i32, %arg1: memref<1x128xf32, #tpu.memory_space<vmem>>, %arg2: memref<1x128xf32, #tpu.memory_space<vmem>>, %arg3: memref<1x128xf32, #tpu.memory_space<vmem>>, %arg4: memref<1x128xf32, #tpu.memory_space<vmem>>) attributes {dimension_semantics = [#tpu.dimension_semantics<parallel>], iteration_bounds = array<i64: 1>, scalar_prefetch = 0 : i64, scratch_operands = 0 : i64, tpu.core_type = #tpu.core_type<tc>, window_params = [{transform_indices = @transform_0, window_bounds = array<i64: 1, 128>}, {pipeline_mode = #tpu.pipeline_mode<synchronous>, transform_indices = @transform_1, window_bounds = array<i64: 1, 128>}, {pipeline_mode = #tpu.pipeline_mode<synchronous>, transform_indices = @transform_2, window_bounds = array<i64: 1, 128>}, {transform_indices = @transform_3, window_bounds = array<i64: 1, 128>}]} {
    %c0 = arith.constant 0 : index
    %c0_0 = arith.constant 0 : index
    %0 = vector.load %arg1[%c0, %c0_0] : memref<1x128xf32, #tpu.memory_space<vmem>>, vector<1x128xf32>
    %c0_1 = arith.constant 0 : index
    %c0_2 = arith.constant 0 : index
    %1 = vector.load %arg2[%c0_1, %c0_2] : memref<1x128xf32, #tpu.memory_space<vmem>>, vector<1x128xf32>
    %2 = arith.mulf %0, %1 : vector<1x128xf32>
    %c0_3 = arith.constant 0 : index
    %c0_4 = arith.constant 0 : index
    %3 = vector.load %arg3[%c0_3, %c0_4] : memref<1x128xf32, #tpu.memory_space<vmem>>, vector<1x128xf32>
    %4 = arith.addf %2, %3 : vector<1x128xf32>
    %c0_5 = arith.constant 0 : index
    %c0_6 = arith.constant 0 : index
    %5 = vector.load %arg4[%c0_5, %c0_6] : memref<1x128xf32, #tpu.memory_space<vmem>>, vector<1x128xf32>
    tpu.vector_store %arg4[%c0_5, %c0_6], %4 {strides = array<i32>} : memref<1x128xf32, #tpu.memory_space<vmem>>, vector<1x128xf32>,
    return
  }
  func.func @transform_0(%arg0: i32) -> (i32, i32) {
    %c0_i32 = arith.constant 0 : i32
    %c0_i32_0 = arith.constant 0 : i32
    return %arg0, %c0_i32 : i32, i32
  }
  func.func @transform_1(%arg0: i32) -> (i32, i32) {
    %c0_i32 = arith.constant 0 : i32
    %c0_i32_0 = arith.constant 0 : i32
    %c0_i32_1 = arith.constant 0 : i32
    return %c0_i32, %c0_i32_0 : i32, i32
  }
  func.func @transform_2(%arg0: i32) -> (i32, i32) {
    %c0_i32 = arith.constant 0 : i32
    %c0_i32_0 = arith.constant 0 : i32
    %c0_i32_1 = arith.constant 0 : i32
    return %c0_i32, %c0_i32_0 : i32, i32
  }
  func.func @transform_3(%arg0: i32) -> (i32, i32) {
    %c0_i32 = arith.constant 0 : i32
    %c0_i32_0 = arith.constant 0 : i32
    return %arg0, %c0_i32 : i32, i32
  }
}

</mosaic_0001>

<llo_original>
// kernel: tile.13
$region0: #{tile.13}
  #allocation0 [shape = 's32[1]{0}', space=sflag, size = 0x4, scoped, tag = 'scoped memory for tile.13']
  %s0 = inlined_call_operand.vmem [shape: f32[8], index: 0, kind: input, shape index: {}]
  %s1 = inlined_call_operand.vmem [shape: f32[16,8], index: 1, kind: output, shape index: {}]
  // Predicated region
  $region2: #{tile.13} parent=0 // pred_check
    _
  $region3: #{tile.13} parent=0 // pred_check_branch
    %3 = sbr.rel (0) target = $region5
  $region4: #{tile.13} parent=0 // pred_region
    _
  $region5: #{tile.13} parent=0 // pred_fallthru
    _
  %v4 = vld [vmem:[%s0] ss:$0 sm:$0xff]
  %5 = vst [vmem:[%s1] sm:$0xff] %v4
  %s6 = scalar_lea.vmem %s1, 8
  %7 = vst [vmem:[%s6] sm:$0xff] %v4

// kernel: tile.14
$region0: #{tile.14}
  %s0 = inlined_call_operand.vmem [shape: f32[16,8], index: 0, kind: input, shape index: {}]
  %s1 = inlined_call_operand.vmem [shape: f32[1,128], index: 1, kind: output, shape index: {}]
  $region1: #{tile.14} parent=0
    #allocation0 [shape = 'u8[4096]{0}', space=vmem, size = 0x1000, scoped, tag = 'scoped mem for output reshape']
    %v2 = vld [vmem:[%s0] sm:$0x1]
    %vm3 = vcmask 64512
    %4 = vst.msk [vmem:[#allocation0] sm:$0x1] %vm3, %v2
    %s5 = scalar_lea.vmem %s0, 15
    %v6 = vld [vmem:[%s5] sm:$0x1]
    %7 = vrot.lane.b32.xlu0 %v6, 120
    %v8 = vpop.permute.xlu0 %7
    %vm9 = vcmask 1048512
    %10 = vst.msk [vmem:[#allocation0] sm:$0x1] %vm9, %v8
    %s11 = scalar_lea.vmem %s0, 14
    %v12 = vld [vmem:[%s11] sm:$0x1]
    %13 = vrot.lane.b32.xlu0 %v12, 112
    %v14 = vpop.permute.xlu0 %13
    %vm15 = vcmask 982912
    %16 = vst.msk [vmem:[#allocation0] sm:$0x1] %vm15, %v14
    %s17 = scalar_lea.vmem %s0, 13
    %v18 = vld [vmem:[%s17] sm:$0x1]
    %19 = vrot.lane.b32.xlu0 %v18, 104
    %v20 = vpop.permute.xlu0 %19
    %vm21 = vcmask 917312
    %22 = vst.msk [vmem:[#allocation0] sm:$0x1] %vm21, %v20
    %s23 = scalar_lea.vmem %s0, 12
    %v24 = vld [vmem:[%s23] sm:$0x1]
    %25 = vrot.lane.b32.xlu0 %v24, 96
    %v26 = vpop.permute.xlu0 %25
    %vm27 = vcmask 851712
    %28 = vst.msk [vmem:[#allocation0] sm:$0x1] %vm27, %v26
    %s29 = scalar_lea.vmem %s0, 11
    %v30 = vld [vmem:[%s29] sm:$0x1]
    %31 = vrot.lane.b32.xlu0 %v30, 88
    %v32 = vpop.permute.xlu0 %31
    %vm33 = vcmask 786112
    %34 = vst.msk [vmem:[#allocation0] sm:$0x1] %vm33, %v32
    %s35 = scalar_lea.vmem %s0, 10
    %v36 = vld [vmem:[%s35] sm:$0x1]
    %37 = vrot.lane.b32.xlu0 %v36, 80
    %v38 = vpop.permute.xlu0 %37
    %vm39 = vcmask 720512
    %40 = vst.msk [vmem:[#allocation0] sm:$0x1] %vm39, %v38
    %s41 = scalar_lea.vmem %s0, 9
    %v42 = vld [vmem:[%s41] sm:$0x1]
    %43 = vrot.lane.b32.xlu0 %v42, 72
    %v44 = vpop.permute.xlu0 %43
    %vm45 = vcmask 654912
    %46 = vst.msk [vmem:[#allocation0] sm:$0x1] %vm45, %v44
    %s47 = scalar_lea.vmem %s0, 8
    %v48 = vld [vmem:[%s47] sm:$0x1]
    %49 = vrot.lane.b32.xlu0 %v48, 64
    %v50 = vpop.permute.xlu0 %49
    %vm51 = vcmask 589312
    %52 = vst.msk [vmem:[#allocation0] sm:$0x1] %vm51, %v50
    %s53 = scalar_lea.vmem %s0, 7
    %v54 = vld [vmem:[%s53] sm:$0x1]
    %55 = vrot.lane.b32.xlu0 %v54, 56
    %v56 = vpop.permute.xlu0 %55
    %vm57 = vcmask 523712
    %58 = vst.msk [vmem:[#allocation0] sm:$0x1] %vm57, %v56
    %s59 = scalar_lea.vmem %s0, 6
    %v60 = vld [vmem:[%s59] sm:$0x1]
    %61 = vrot.lane.b32.xlu0 %v60, 48
    %v62 = vpop.permute.xlu0 %61
    %vm63 = vcmask 458112
    %64 = vst.msk [vmem:[#allocation0] sm:$0x1] %vm63, %v62
    %s65 = scalar_lea.vmem %s0, 5
    %v66 = vld [vmem:[%s65] sm:$0x1]
    %67 = vrot.lane.b32.xlu0 %v66, 40
    %v68 = vpop.permute.xlu0 %67
    %vm69 = vcmask 392512
    %70 = vst.msk [vmem:[#allocation0] sm:$0x1] %vm69, %v68
    %s71 = scalar_lea.vmem %s0, 4
    %v72 = vld [vmem:[%s71] sm:$0x1]
    %73 = vrot.lane.b32.xlu0 %v72, 32
    %v74 = vpop.permute.xlu0 %73
    %vm75 = vcmask 326912
    %76 = vst.msk [vmem:[#allocation0] sm:$0x1] %vm75, %v74
    %s77 = scalar_lea.vmem %s0, 3
    %v78 = vld [vmem:[%s77] sm:$0x1]
    %79 = vrot.lane.b32.xlu0 %v78, 24
    %v80 = vpop.permute.xlu0 %79
    %vm81 = vcmask 261312
    %82 = vst.msk [vmem:[#allocation0] sm:$0x1] %vm81, %v80
    %s83 = scalar_lea.vmem %s0, 2
    %v84 = vld [vmem:[%s83] sm:$0x1]
    %85 = vrot.lane.b32.xlu0 %v84, 16
    %v86 = vpop.permute.xlu0 %85
    %vm87 = vcmask 195712
    %88 = vst.msk [vmem:[#allocation0] sm:$0x1] %vm87, %v86
    %s89 = scalar_lea.vmem %s0, 1
    %v90 = vld [vmem:[%s89] sm:$0x1]
    %91 = vrot.lane.b32.xlu0 %v90, 8
    %v92 = vpop.permute.xlu0 %91
    %vm93 = vcmask 130112
    %94 = vst.msk [vmem:[#allocation0] sm:$0x1] %vm93, %v92
    %s96 = sshllo.u32 0, 1
    %v98 = vld [vmem:[#allocation0] sm:%s96]
    %s99 = sshllo.u32 0, 1
    %100 = vst [vmem:[%s1] sm:%s99] %v98

// kernel: patch_merging_tconv.3
$region0: #{patch_merging_tconv.3}
  #allocation0 [shape = 'u32[]', space=smem, size = 0x4, offset = 0x4, fixed_abs, tag = 'smem constant byte address 0x4 - core index']
  #allocation1 [shape = 'u32[144,128]{1,0:T(1,128)}', space=vmem, size = 0x12000, scoped, tag = 'internal scratch']
  %s0 = inlined_call_operand.vmem [shape: f32[1,128], index: 0, kind: input, shape index: {}]
  %s1 = inlined_call_operand.vmem [shape: f32[1,128], index: 1, kind: input, shape index: {}]
  %s2 = inlined_call_operand.vmem [shape: f32[1,128], index: 2, kind: input, shape index: {}]
  %s3 = inlined_call_operand.vmem [shape: f32[1,128], index: 3, kind: output, shape index: {}]
  %s4 = sld [smem:[#allocation0]]
  $region22: #{patch_merging_tconv.3} parent=0
    _
  %s6 = ssub.s32 1, %s4
  %s7 = scalar_select 0, %s6, %s4
  // Predicated region
  $region2: #{patch_merging_tconv.3} parent=0 // pred_check
    _
  $region3: #{patch_merging_tconv.3} parent=0 // pred_check_branch
    %9 = sbr.rel (0) target = $region5
  $region4: #{patch_merging_tconv.3} parent=0 // pred_region
    _
  $region5: #{patch_merging_tconv.3} parent=0 // pred_fallthru
    _
  // Predicated region
  $region6: #{patch_merging_tconv.3} parent=0 // pred_check
    _
  $region7: #{patch_merging_tconv.3} parent=0 // pred_check_branch
    %11 = sbr.rel (0) target = $region9
  $region8: #{patch_merging_tconv.3} parent=0 // pred_region
    _
  $region9: #{patch_merging_tconv.3} parent=0 // pred_fallthru
    _
  // Predicated region
  $region10: #{patch_merging_tconv.3} parent=0 // pred_check
    _
  $region11: #{patch_merging_tconv.3} parent=0 // pred_check_branch
    %13 = sbr.rel (0) target = $region13
  $region12: #{patch_merging_tconv.3} parent=0 // pred_region
    _
  $region13: #{patch_merging_tconv.3} parent=0 // pred_fallthru
    _
  %v14 = vld [vmem:[%s0] sm:$0x1]
  %v15 = vld [vmem:[%s1] sm:$0x1]
  %v16 = vmul.f32 %v14, %v15
  %v17 = vld [vmem:[%s2] sm:$0x1]
  %v18 = vadd.f32 %v16, %v17
  %19 = vst [vmem:[%s3] sm:$0x1] %v18
  // Predicated region
  $region14: #{patch_merging_tconv.3} parent=0 // pred_check
    _
  $region15: #{patch_merging_tconv.3} parent=0 // pred_check_branch
    %21 = sbr.rel (0) target = $region17
  $region16: #{patch_merging_tconv.3} parent=0 // pred_region
    _
  $region17: #{patch_merging_tconv.3} parent=0 // pred_fallthru
    _
  // Predicated region
  $region18: #{patch_merging_tconv.3} parent=0 // pred_check
    _
  $region19: #{patch_merging_tconv.3} parent=0 // pred_check_branch
    %23 = sbr.rel (0) target = $region21
  $region20: #{patch_merging_tconv.3} parent=0 // pred_region
    _
  $region21: #{patch_merging_tconv.3} parent=0 // pred_fallthru
    _

// kernel: patch_merging_tconv.2
$region0: #{patch_merging_tconv.2}
  #allocation0 [shape = 'u32[]', space=smem, size = 0x4, offset = 0x4, fixed_abs, tag = 'smem constant byte address 0x4 - core index']
  #allocation1 [shape = 'u32[144,128]{1,0:T(1,128)}', space=vmem, size = 0x12000, scoped, tag = 'internal scratch']
  %s0 = inlined_call_operand.vmem [shape: f32[2,16,8], index: 0, kind: input, shape index: {}, may-alias: {0,1}]
  %s1 = inlined_call_operand.vmem [shape: f32[2,16,8], index: 1, kind: input, shape index: {}, may-alias: {0,1}]
  %s2 = inlined_call_operand.vmem [shape: f32[32,8], index: 2, kind: input, shape index: {}]
  %s3 = inlined_call_operand.vmem [shape: f32[1,8], index: 3, kind: input, shape index: {}]
  %s4 = inlined_call_operand.vmem [shape: f32[2,8,8], index: 4, kind: output, shape index: {0}]
  %s5 = inlined_call_operand.vmem [shape: f32[2,1,8,8], index: 5, kind: output, shape index: {1}]
  %6 = xla_tuple %s4, %s5
  %s7 = sld [smem:[#allocation0]]
  $region57: #{patch_merging_tconv.2} parent=0
    _
  %s9 = ssub.s32 1, %s7
  %s10 = scalar_select 0, %s9, %s7
  loop: start=0, step=1, limit=4
  $region2: #{patch_merging_tconv.2} parent=0 // loop_pre_header
    _
  $region3: #{patch_merging_tconv.2} parent=0 // loop_header
    %s12 = sphi 0, %s16
    %p13 = scmp.ge.s32.totalorder %s12, 4
    %s19 = sphi 0, %s31
    %s20 = sphi 0, %s27
    %s21 = sphi 0, %s19
    %s22 = sphi 0, %s20
    %s23 = sphi 0, %s21
    %s24 = sphi 0, %s22
    %s36 = sphi 0, %s38
    %s39 = sphi 0, %s36
    %s40 = sphi 0, %s39
    %s56 = sphi 0, %s40
    %s66 = sphi 0, %s68
    %s69 = sphi 0, %s66
    %s70 = sphi 0, %s69
    %s86 = sphi 0, %s70
    %s90 = sphi 0, %s90
    %s92 = sphi 0, %s90
    %s93 = sphi 0, %s92
    %s107 = sphi 0, %s93
    %s111 = sphi 0, %s111
    %s113 = sphi 0, %s111
    %s114 = sphi 0, %s113
    %s128 = sphi 0, %s114
    %s136 = sphi 0, %s138
    %s139 = sphi 0, %s136
    %s140 = sphi 0, %s139
    %s156 = sphi 0, %s140
    %s164 = sphi 0, %s166
    %s167 = sphi 0, %s164
    %s168 = sphi 0, %s167
    %s184 = sphi 0, %s168
  $region4: #{patch_merging_tconv.2} parent=0 // loop_header_branch
    %15 = sbr.rel (%p13) target = $region8
  $region5: #{patch_merging_tconv.2} parent=0 // loop_body
    %s17 = ssub.s32 %s12, 1
    %s18 = ssub.s32 %s12, 2
    %s25 = sadd.s32 1, %s20
    %p26 = scmp.ge.s32.totalorder %s25, 1
    %s27 = scalar_select %p26, 0, %s25
    %s28 = sadd.s32 1, %s19
    %s29 = scalar_select %p26, %s28, %s19
    %p30 = scmp.ge.s32.totalorder %s29, 2
    %s31 = scalar_select %p30, 0, %s29
    %s32 = ssub.s32 %s19, %s31
    %s33 = ssub.s32 %s20, %s27
    %s34 = sor.u32 %s32, %s33
    %p35 = scmp.eq.s32.totalorder %s34, 0
    %s37 = sadd.s32 %s36, 1
    %s38 = scalar_select %p35, %s36, %s37
    %p41 = pneg %p35
    %p42 = scmp.eq.s32.totalorder %s12, 1
    %p43 = por %p41, %p42
    %p44 = scmp.ne.s32.totalorder %s36, %s39
    %p45 = scmp.eq.s32.totalorder %s12, 0
    %p46 = por %p44, %p45
    %p47 = scmp.ne.s32.totalorder %s36, %s39
    %p48 = scmp.eq.s32.totalorder %s17, 1
    %p49 = por %p47, %p48
    %p50 = scmp.ne.s32.totalorder %s39, %s40
    %p51 = scmp.eq.s32.totalorder %s17, 0
    %p52 = por %p50, %p51
    %p53 = scmp.ne.s32.totalorder %s39, %s40
    %p54 = scmp.eq.s32.totalorder %s18, 1
    %p55 = por %p53, %p54
    %p57 = scmp.ne.s32.totalorder %s40, %s56
    %p58 = scmp.eq.s32.totalorder %s18, 0
    %p59 = por %p57, %p58
    %s60 = sadd.s32 %s20, 1
    %s61 = sadd.s32 %s27, 1
    %s62 = ssub.s32 %s19, %s31
    %s63 = ssub.s32 %s60, %s61
    %s64 = sor.u32 %s62, %s63
    %p65 = scmp.eq.s32.totalorder %s64, 0
    %s67 = sadd.s32 %s66, 1
    %s68 = scalar_select %p65, %s66, %s67
    %p71 = pneg %p65
    %p72 = scmp.eq.s32.totalorder %s12, 1
    %p73 = por %p71, %p72
    %p74 = scmp.ne.s32.totalorder %s66, %s69
    %p75 = scmp.eq.s32.totalorder %s12, 0
    %p76 = por %p74, %p75
    %p77 = scmp.ne.s32.totalorder %s66, %s69
    %p78 = scmp.eq.s32.totalorder %s17, 1
    %p79 = por %p77, %p78
    %p80 = scmp.ne.s32.totalorder %s69, %s70
    %p81 = scmp.eq.s32.totalorder %s17, 0
    %p82 = por %p80, %p81
    %p83 = scmp.ne.s32.totalorder %s69, %s70
    %p84 = scmp.eq.s32.totalorder %s18, 1
    %p85 = por %p83, %p84
    %p87 = scmp.ne.s32.totalorder %s70, %s86
    %p88 = scmp.eq.s32.totalorder %s18, 0
    %p89 = por %p87, %p88
    %s91 = sadd.s32 %s90, 1
    %p94 = scmp.eq.s32.totalorder %s12, 1
    %p95 = scmp.ne.s32.totalorder %s90, %s92
    %p96 = scmp.eq.s32.totalorder %s12, 0
    %p97 = por %p95, %p96
    %p98 = scmp.ne.s32.totalorder %s90, %s92
    %p99 = scmp.eq.s32.totalorder %s17, 1
    %p100 = por %p98, %p99
    %p101 = scmp.ne.s32.totalorder %s92, %s93
    %p102 = scmp.eq.s32.totalorder %s17, 0
    %p103 = por %p101, %p102
    %p104 = scmp.ne.s32.totalorder %s92, %s93
    %p105 = scmp.eq.s32.totalorder %s18, 1
    %p106 = por %p104, %p105
    %p108 = scmp.ne.s32.totalorder %s93, %s107
    %p109 = scmp.eq.s32.totalorder %s18, 0
    %p110 = por %p108, %p109
    %s112 = sadd.s32 %s111, 1
    %p115 = scmp.eq.s32.totalorder %s12, 1
    %p116 = scmp.ne.s32.totalorder %s111, %s113
    %p117 = scmp.eq.s32.totalorder %s12, 0
    %p118 = por %p116, %p117
    %p119 = scmp.ne.s32.totalorder %s111, %s113
    %p120 = scmp.eq.s32.totalorder %s17, 1
    %p121 = por %p119, %p120
    %p122 = scmp.ne.s32.totalorder %s113, %s114
    %p123 = scmp.eq.s32.totalorder %s17, 0
    %p124 = por %p122, %p123
    %p125 = scmp.ne.s32.totalorder %s113, %s114
    %p126 = scmp.eq.s32.totalorder %s18, 1
    %p127 = por %p125, %p126
    %p129 = scmp.ne.s32.totalorder %s114, %s128
    %p130 = scmp.eq.s32.totalorder %s18, 0
    %p131 = por %p129, %p130
    %s132 = ssub.s32 %s19, %s31
    %s133 = ssub.s32 %s20, %s27
    %s134 = sor.u32 %s132, %s133
    %p135 = scmp.eq.s32.totalorder %s134, 0
    %s137 = sadd.s32 %s136, 1
    %s138 = scalar_select %p135, %s136, %s137
    %p141 = pneg %p135
    %p142 = scmp.eq.s32.totalorder %s12, 1
    %p143 = por %p141, %p142
    %p144 = scmp.ne.s32.totalorder %s136, %s139
    %p145 = scmp.eq.s32.totalorder %s12, 0
    %p146 = por %p144, %p145
    %p147 = scmp.ne.s32.totalorder %s136, %s139
    %p148 = scmp.eq.s32.totalorder %s17, 1
    %p149 = por %p147, %p148
    %p150 = scmp.ne.s32.totalorder %s139, %s140
    %p151 = scmp.eq.s32.totalorder %s17, 0
    %p152 = por %p150, %p151
    %p153 = scmp.ne.s32.totalorder %s139, %s140
    %p154 = scmp.eq.s32.totalorder %s18, 1
    %p155 = por %p153, %p154
    %p157 = scmp.ne.s32.totalorder %s140, %s156
    %p158 = scmp.eq.s32.totalorder %s18, 0
    %p159 = por %p157, %p158
    %s160 = ssub.s32 %s19, %s31
    %s161 = ssub.s32 %s20, %s27
    %s162 = sor.u32 %s160, %s161
    %p163 = scmp.eq.s32.totalorder %s162, 0
    %s165 = sadd.s32 %s164, 1
    %s166 = scalar_select %p163, %s164, %s165
    %p169 = pneg %p163
    %p170 = scmp.eq.s32.totalorder %s12, 1
    %p171 = por %p169, %p170
    %p172 = scmp.ne.s32.totalorder %s164, %s167
    %p173 = scmp.eq.s32.totalorder %s12, 0
    %p174 = por %p172, %p173
    %p175 = scmp.ne.s32.totalorder %s164, %s167
    %p176 = scmp.eq.s32.totalorder %s17, 1
    %p177 = por %p175, %p176
    %p178 = scmp.ne.s32.totalorder %s167, %s168
    %p179 = scmp.eq.s32.totalorder %s17, 0
    %p180 = por %p178, %p179
    %p181 = scmp.ne.s32.totalorder %s167, %s168
    %p182 = scmp.eq.s32.totalorder %s18, 1
    %p183 = por %p181, %p182
    %p185 = scmp.ne.s32.totalorder %s168, %s184
    %p186 = scmp.eq.s32.totalorder %s18, 0
    %p187 = por %p185, %p186
    %p188 = scmp.le.s32.totalorder 1, %s12
    %p189 = scmp.lt.s32.totalorder %s12, 3
    %p190 = pnand %p188, %p189
    %p191 = pneg %p190
    // Predicated region
    $region9: #{patch_merging_tconv.2} parent=5 // pred_check
      _
    $region10: #{patch_merging_tconv.2} parent=5 // pred_check_branch
      %193 = sbr.rel (%p190) target = $region12
    $region11: #{patch_merging_tconv.2} parent=5 // pred_region
      %s194 = ssub.s32 %s12, 1
      // Predicated region
      $region13: #{patch_merging_tconv.2} parent=11 // pred_check
        %p195 = pneg %p103
      $region14: #{patch_merging_tconv.2} parent=11 // pred_check_branch
        %197 = sbr.rel (%p195) target = $region16
      $region15: #{patch_merging_tconv.2} parent=11 // pred_region
        _
      $region16: #{patch_merging_tconv.2} parent=11 // pred_fallthru
        _
      // Predicated region
      $region17: #{patch_merging_tconv.2} parent=11 // pred_check
        %p198 = pneg %p124
      $region18: #{patch_merging_tconv.2} parent=11 // pred_check_branch
        %200 = sbr.rel (%p198) target = $region20
      $region19: #{patch_merging_tconv.2} parent=11 // pred_region
        _
      $region20: #{patch_merging_tconv.2} parent=11 // pred_fallthru
        _
    $region12: #{patch_merging_tconv.2} parent=5 // pred_fallthru
      _
    %p201 = scmp.lt.s32.totalorder %s12, 2
    // Predicated region
    $region21: #{patch_merging_tconv.2} parent=5 // pred_check
      %p202 = pneg %p201
    $region22: #{patch_merging_tconv.2} parent=5 // pred_check_branch
      %204 = sbr.rel (%p202) target = $region24
    $region23: #{patch_merging_tconv.2} parent=5 // pred_region
      // Predicated region
      $region25: #{patch_merging_tconv.2} parent=23 // pred_check
        %p205 = pneg %p46
      $region26: #{patch_merging_tconv.2} parent=23 // pred_check_branch
        %207 = sbr.rel (%p205) target = $region28
      $region27: #{patch_merging_tconv.2} parent=23 // pred_region
        %p208 = scmp.lt.s32.totalorder %s19, 1
        %s209 = scalar_select %p208, %s19, 1
        %p210 = scmp.lt.s32.totalorder %s20, 1
        %s211 = scalar_select %p210, %s20, 1
        %s212 = smul.addr %s209, 2
        %s213 = sadd.s32 %s211, %s212
        %s214 = smul.addr %s213, 8
        %s215 = scalar_lea.vmem %s0, %s214
      $region28: #{patch_merging_tconv.2} parent=23 // pred_fallthru
        _
      // Predicated region
      $region29: #{patch_merging_tconv.2} parent=23 // pred_check
        %p216 = pneg %p76
      $region30: #{patch_merging_tconv.2} parent=23 // pred_check_branch
        %218 = sbr.rel (%p216) target = $region32
      $region31: #{patch_merging_tconv.2} parent=23 // pred_region
        %s219 = sadd.s32 %s20, 1
        %p220 = scmp.lt.s32.totalorder %s19, 1
        %s221 = scalar_select %p220, %s19, 1
        %p222 = scmp.lt.s32.totalorder %s219, 1
        %s223 = scalar_select %p222, %s219, 1
        %s224 = smul.addr %s221, 2
        %s225 = sadd.s32 %s223, %s224
        %s226 = smul.addr %s225, 8
        %s227 = scalar_lea.vmem %s1, %s226
        %s228 = sadd.s32 %s20, 1
      $region32: #{patch_merging_tconv.2} parent=23 // pred_fallthru
        _
    $region24: #{patch_merging_tconv.2} parent=5 // pred_fallthru
      _
    %p229 = scmp.le.s32.totalorder 1, %s12
    %p230 = scmp.lt.s32.totalorder %s12, 3
    %p231 = pnand %p229, %p230
    %p232 = pneg %p231
    // Predicated region
    $region33: #{patch_merging_tconv.2} parent=5 // pred_check
      _
    $region34: #{patch_merging_tconv.2} parent=5 // pred_check_branch
      %234 = sbr.rel (%p231) target = $region36
    $region35: #{patch_merging_tconv.2} parent=5 // pred_region
      %s235 = ssub.s32 %s12, 1
      %p236 = scmp.lt.s32.totalorder %s21, 1
      %s237 = scalar_select %p236, %s21, 1
      %p238 = scmp.lt.s32.totalorder %s22, 1
      %s239 = scalar_select %p238, %s22, 1
      %s240 = smul.addr %s237, 2
      %s241 = sadd.s32 %s239, %s240
      %s242 = smul.addr %s241, 8
      %s243 = scalar_lea.vmem %s0, %s242
      %p244 = pneg %p52
      %p245 = pneg %p49
      %s246 = sadd.s32 %s22, 1
      %p247 = scmp.lt.s32.totalorder %s21, 1
      %s248 = scalar_select %p247, %s21, 1
      %p249 = scmp.lt.s32.totalorder %s246, 1
      %s250 = scalar_select %p249, %s246, 1
      %s251 = smul.addr %s248, 2
      %s252 = sadd.s32 %s250, %s251
      %s253 = smul.addr %s252, 8
      %s254 = scalar_lea.vmem %s1, %s253
      %p255 = pneg %p82
      %p256 = pneg %p79
      %p257 = pneg %p103
      %p258 = pneg %p100
      %p259 = pneg %p124
      %p260 = pneg %p121
      %p261 = pneg %p152
      %p262 = pneg %p149
      %p263 = scmp.lt.s32.totalorder %s21, 1
      %s264 = scalar_select %p263, %s21, 1
      %p265 = scmp.lt.s32.totalorder %s22, 0
      %s266 = scalar_select %p265, %s22, 0
      %s267 = sadd.s32 %s266, %s264
      %s268 = smul.addr %s267, 8
      %s269 = scalar_lea.vmem %s4, %s268
      %p270 = pneg %p180
      %p271 = pneg %p177
      %p272 = scmp.lt.s32.totalorder %s21, 1
      %s273 = scalar_select %p272, %s21, 1
      %p274 = scmp.lt.s32.totalorder %s22, 0
      %s275 = scalar_select %p274, %s22, 0
      %s276 = sadd.s32 %s275, %s273
      %s277 = smul.addr %s276, 8
      %s278 = scalar_lea.vmem %s5, %s277
      %p279 = scmp.lt.s32.totalorder %s21, 1
      %s280 = scalar_select %p279, %s21, 1
      %p281 = scmp.lt.s32.totalorder %s22, 1
      %s282 = scalar_select %p281, %s22, 1
      %s283 = smul.addr %s280, 2
      %s284 = sadd.s32 %s282, %s283
      %s285 = smul.addr %s284, 8
      %s286 = scalar_lea.vmem %s0, %s285
      %s287 = sadd.s32 %s22, 1
      %p288 = scmp.lt.s32.totalorder %s21, 1
      %s289 = scalar_select %p288, %s21, 1
      %p290 = scmp.lt.s32.totalorder %s287, 1
      %s291 = scalar_select %p290, %s287, 1
      %s292 = smul.addr %s289, 2
      %s293 = sadd.s32 %s291, %s292
      %s294 = smul.addr %s293, 8
      %s295 = scalar_lea.vmem %s1, %s294
      %s296 = sadd.s32 %s22, 1
      %p297 = scmp.lt.s32.totalorder %s21, 1
      %s298 = scalar_select %p297, %s21, 1
      %p299 = scmp.lt.s32.totalorder %s22, 0
      %s300 = scalar_select %p299, %s22, 0
      %s301 = sadd.s32 %s300, %s298
      %s302 = smul.addr %s301, 8
      %s303 = scalar_lea.vmem %s4, %s302
      %p304 = scmp.lt.s32.totalorder %s21, 1
      %s305 = scalar_select %p304, %s21, 1
      %p306 = scmp.lt.s32.totalorder %s22, 0
      %s307 = scalar_select %p306, %s22, 0
      %s308 = sadd.s32 %s307, %s305
      %s309 = smul.addr %s308, 8
      %s310 = scalar_lea.vmem %s5, %s309
      %v311 = vld [vmem:[%s286] sm:$0xff]
      %v312 = vld [vmem:[%s295] sm:$0xff]
      %vm315 = vcmask 1046528
      %v316 = vrot.slane %v311, 1
      %v317 = vrot.slane %v312, 1
      %v318 = vsel %vm315, %v316, %v317
      %319 = vrot.lane.b32.xlu0 %v318, 8
      %v320 = vpop.permute.xlu0 %319
      %vm322 = vcmask 1045504
      %v323 = vrot.slane %v311, 2
      %v324 = vrot.slane %v312, 2
      %v325 = vsel %vm322, %v323, %v324
      %326 = vrot.lane.b32.xlu0 %v325, 16
      %v327 = vpop.permute.xlu0 %326
      %vm329 = vcmask 1044480
      %v330 = vrot.slane %v311, 3
      %v331 = vrot.slane %v312, 3
      %v332 = vsel %vm329, %v330, %v331
      %333 = vrot.lane.b32.xlu0 %v332, 24
      %v334 = vpop.permute.xlu0 %333
      %vm336 = vcmask 64512
      %v337 = vsel %vm336, %v311, %v320
      %vm338 = vcmask 130048
      %v339 = vsel %vm338, %v337, %v327
      %vm340 = vcmask 195584
      %v341 = vsel %vm340, %v339, %v334
      %v342 = vld [vmem:[%s2] sm:$0xff]
      %v343 = vld [vmem:[%s2 + $0x8] sm:$0xff]
      %v344 = vld [vmem:[%s2 + $0x10] sm:$0xff]
      %v345 = vld [vmem:[%s2 + $0x18] sm:$0xff]
      %v346 = vld [vmem:[%s3] sm:$0x1]
      %v348 = vlaneseq
      %v349 = vshrl.u32 %v348, 7
      %v350 = vsub.s32 0, %v349
      %v351 = vrot.slane %v346, %v350
      %vm353 = vcmask 261120
      %v355 = vsel %vm353, %v341, 0
      %357 = vmatprep.subr.mxu0 0.0
      %358 = vmatpush1.msra.mxu0 %v342
      %359 = vmatprep.subr.mxu0 0.0
      %360 = vmatpush1.msra.mxu0 %v343
      %361 = vmatprep.subr.mxu0 0.0
      %362 = vmatpush1.msra.mxu0 %v344
      %363 = vmatprep.subr.mxu0 0.0
      %364 = vmatpush1.msra.mxu0 %v345
      %365 = vmatprep.subr.mxu0 0.0
      %366 = vmatpush1.msra.mxu0 0.0
      %367 = vmatprep.subr.mxu0 0.0
      %368 = vmatpush1.msra.mxu0 0.0
      %369 = vmatprep.subr.mxu0 0.0
      %370 = vmatpush1.msra.mxu0 0.0
      %371 = vmatprep.subr.mxu0 0.0
      %372 = vmatpush1.msra.mxu0 0.0
      %373 = vmatprep.subr.mxu0 0.0
      %374 = vmatpush1.msra.mxu0 0.0
      %375 = vmatprep.subr.mxu0 0.0
      %376 = vmatpush1.msra.mxu0 0.0
      %377 = vmatprep.subr.mxu0 0.0
      %378 = vmatpush1.msra.mxu0 0.0
      %379 = vmatprep.subr.mxu0 0.0
      %380 = vmatpush1.msra.mxu0 0.0
      %381 = vmatprep.subr.mxu0 0.0
      %382 = vmatpush1.msra.mxu0 0.0
      %383 = vmatprep.subr.mxu0 0.0
      %384 = vmatpush1.msra.mxu0 0.0
      %385 = vmatprep.subr.mxu0 0.0
      %386 = vmatpush1.msra.mxu0 0.0
      %387 = vmatprep.subr.mxu0 0.0
      %388 = vmatpush1.msra.mxu0 0.0
      %389 = vmatprep.subr.mxu0 0.0
      %390 = vmatpush1.msra.mxu0 0.0
      %391 = vmatprep.subr.mxu0 0.0
      %392 = vmatpush1.msra.mxu0 0.0
      %393 = vmatprep.subr.mxu0 0.0
      %394 = vmatpush1.msra.mxu0 0.0
      %395 = vmatprep.subr.mxu0 0.0
      %396 = vmatpush1.msra.mxu0 0.0
      %397 = vmatprep.subr.mxu0 0.0
      %398 = vmatpush1.msra.mxu0 0.0
      %399 = vmatprep.subr.mxu0 0.0
      %400 = vmatpush1.msra.mxu0 0.0
      %401 = vmatprep.subr.mxu0 0.0
      %402 = vmatpush1.msra.mxu0 0.0
      %403 = vmatprep.subr.mxu0 0.0
      %404 = vmatpush1.msra.mxu0 0.0
      %405 = vmatprep.subr.mxu0 0.0
      %406 = vmatpush1.msra.mxu0 0.0
      %407 = vmatprep.subr.mxu0 0.0
      %408 = vmatpush1.msra.mxu0 0.0
      %409 = vmatprep.subr.mxu0 0.0
      %410 = vmatpush1.msra.mxu0 0.0
      %411 = vmatprep.subr.mxu0 0.0
      %412 = vmatpush1.msra.mxu0 0.0
      %413 = vmatprep.subr.mxu0 0.0
      %414 = vmatpush1.msra.mxu0 0.0
      %415 = vmatprep.subr.mxu0 0.0
      %416 = vmatpush1.msra.mxu0 0.0
      %417 = vmatprep.subr.mxu0 0.0
      %418 = vmatpush1.msra.mxu0 0.0
      %419 = vmatprep.subr.mxu0 0.0
      %420 = vmatpush1.msra.mxu0 0.0
      %421 = vmatprep.mubr.f32.mxu0 0.0
      %422 = vmatmul.mubr.f32.gmra.mrb[0].mxu0 %v355
      %v423 = vpop.f32.mrb[0].mxu0
      %v424 = vadd.f32 %v351, %v423
      %v425 = vpop.f32.mrb[0].mxu0
      %426 = vdwg.mxu0
      %427 = vst.msk [vmem:[%s303] sm:$0xff] %vm336, %v424
      %v428 = vlaneseq
      %v429 = vshrl.u32 %v428, 7
      %s430 = smul.u32 %s22, 8
      %v431 = vstv %s430
      %v432 = vadd.s32 %v429, %v431
      %vm433 = vcmp.lt.s32.totalorder %v432, 8
      %v434 = vsel %vm433, 1, 0
      %v435 = vcvt.s32.f32 %v434
      %v436 = vmul.f32 %v424, %v435
      %v437 = vsel %vm336, %v436, 0.0
      %v438 = vrot.slane %v437, 4
      %v439 = vadd.f32 %v437, %v438
      %v440 = vrot.slane %v439, 2
      %v441 = vadd.f32 %v439, %v440
      %v442 = vrot.slane %v441, 1
      %v443 = vadd.f32 %v441, %v442
      %v444 = vmul.f32 %v436, %v424
      %v445 = vsel %vm336, %v444, 0.0
      %v446 = vrot.slane %v445, 4
      %v447 = vadd.f32 %v445, %v446
      %v448 = vrot.slane %v447, 2
      %v449 = vadd.f32 %v447, %v448
      %v450 = vrot.slane %v449, 1
      %v451 = vadd.f32 %v449, %v450
      %vm452 = vcmask 1040384
      %v453 = vsel %vm452, %v443, %v451
      %vm454 = vcmask 1041408
      %v455 = vsel %vm454, %v453, 0.0
      %456 = vst.msk [vmem:[%s310] sm:$0xff] %vm336, %v455
      %p457 = scmp.lt.s32.totalorder %s21, 1
      %s458 = scalar_select %p457, %s21, 1
      %p459 = scmp.lt.s32.totalorder %s22, 0
      %s460 = scalar_select %p459, %s22, 0
      %s461 = sadd.s32 %s460, %s458
      %s462 = smul.addr %s461, 8
      %s463 = scalar_lea.vmem %s4, %s462
      %p464 = scmp.lt.s32.totalorder %s21, 1
      %s465 = scalar_select %p464, %s21, 1
      %p466 = scmp.lt.s32.totalorder %s22, 0
      %s467 = scalar_select %p466, %s22, 0
      %s468 = sadd.s32 %s467, %s465
      %s469 = smul.addr %s468, 8
      %s470 = scalar_lea.vmem %s5, %s469
      // Predicated region
      $region37: #{patch_merging_tconv.2} parent=35 // pred_check
        %p471 = pneg %p149
      $region38: #{patch_merging_tconv.2} parent=35 // pred_check_branch
        %473 = sbr.rel (%p471) target = $region40
      $region39: #{patch_merging_tconv.2} parent=35 // pred_region
        _
      $region40: #{patch_merging_tconv.2} parent=35 // pred_fallthru
        _
      // Predicated region
      $region41: #{patch_merging_tconv.2} parent=35 // pred_check
        %p474 = pneg %p177
      $region42: #{patch_merging_tconv.2} parent=35 // pred_check_branch
        %476 = sbr.rel (%p474) target = $region44
      $region43: #{patch_merging_tconv.2} parent=35 // pred_region
        _
      $region44: #{patch_merging_tconv.2} parent=35 // pred_fallthru
        _
    $region36: #{patch_merging_tconv.2} parent=5 // pred_fallthru
      _
    %p477 = scmp.le.s32.totalorder 2, %s12
    // Predicated region
    $region45: #{patch_merging_tconv.2} parent=5 // pred_check
      %p478 = pneg %p477
    $region46: #{patch_merging_tconv.2} parent=5 // pred_check_branch
      %480 = sbr.rel (%p478) target = $region48
    $region47: #{patch_merging_tconv.2} parent=5 // pred_region
      %s481 = ssub.s32 %s12, 2
      // Predicated region
      $region49: #{patch_merging_tconv.2} parent=47 // pred_check
        %p482 = pneg %p155
      $region50: #{patch_merging_tconv.2} parent=47 // pred_check_branch
        %484 = sbr.rel (%p482) target = $region52
      $region51: #{patch_merging_tconv.2} parent=47 // pred_region
        %p485 = scmp.lt.s32.totalorder %s23, 1
        %s486 = scalar_select %p485, %s23, 1
        %p487 = scmp.lt.s32.totalorder %s24, 0
        %s488 = scalar_select %p487, %s24, 0
        %s489 = sadd.s32 %s488, %s486
        %s490 = smul.addr %s489, 8
        %s491 = scalar_lea.vmem %s4, %s490
      $region52: #{patch_merging_tconv.2} parent=47 // pred_fallthru
        _
      // Predicated region
      $region53: #{patch_merging_tconv.2} parent=47 // pred_check
        %p492 = pneg %p183
      $region54: #{patch_merging_tconv.2} parent=47 // pred_check_branch
        %494 = sbr.rel (%p492) target = $region56
      $region55: #{patch_merging_tconv.2} parent=47 // pred_region
        %p495 = scmp.lt.s32.totalorder %s23, 1
        %s496 = scalar_select %p495, %s23, 1
        %p497 = scmp.lt.s32.totalorder %s24, 0
        %s498 = scalar_select %p497, %s24, 0
        %s499 = sadd.s32 %s498, %s496
        %s500 = smul.addr %s499, 8
        %s501 = scalar_lea.vmem %s5, %s500
      $region56: #{patch_merging_tconv.2} parent=47 // pred_fallthru
        _
    $region48: #{patch_merging_tconv.2} parent=5 // pred_fallthru
      _
  $region6: #{patch_merging_tconv.2} parent=0 // loop_footer
    %s16 = sadd.s32 1, %s12
  $region7: #{patch_merging_tconv.2} parent=0 // loop_footer_branch
    %11 = sbr.rel target = $region3
  $region8: #{patch_merging_tconv.2} parent=0 // loop_exit
    _

</llo_original>
